<compile_context>
chip_gen: v5e
topology: v5e:2x2
jax: 0.10.0
libtpu: 0.0.40
codegen_flags: <defaults>
</compile_context>

<pallas_src>
import functools

import jax
import jax.numpy as jnp
from jax import lax
from jax.experimental import pallas as pl
from jax.experimental.pallas import tpu as pltpu

EPS = 1e-5  # nn.LayerNorm default eps


def _round_up(x, m):
    return (x + m - 1) // m * m


def _vmem_capacity_bytes():
    try:
        return int(pltpu.get_tpu_info().vmem_capacity_bytes)
    except Exception:
        return 64 << 20  # conservative (v7x-sized) default


# --------------------- Path 1: resident-W kernel ---------------------

def _prenorm_resident_kernel(x_ref, gamma_ref, w_ref, bias_ref, o_ref, *, eps):
    # x_ref:     (tm, D)  row tile of the input (full feature extent, no padding)
    # gamma_ref: (1,  D)  LayerNorm weight (f32)
    # w_ref:     (D,  D)  full linear weight (bf16); constant block index -> fetched once
    # bias_ref:  (1,  D)  fused bias = beta @ W + b (f32)
    # o_ref:     (tm, D)  output row tile
    x = x_ref[...].astype(jnp.float32)
    mean = jnp.mean(x, axis=-1, keepdims=True)
    centered = x - mean
    var = jnp.mean(centered * centered, axis=-1, keepdims=True)
    xn = centered * lax.rsqrt(var + eps)
    y = (xn * gamma_ref[...].astype(jnp.float32)).astype(w_ref.dtype)
    acc = jnp.dot(y, w_ref[...], preferred_element_type=jnp.float32)
    o_ref[...] = (acc + bias_ref[...].astype(jnp.float32)).astype(o_ref.dtype)


# ------------- Path 2: column-tiled fallback (W too big for VMEM) -------------

def _prenorm_coltiled_kernel(x_ref, gamma_ref, w_ref, bias_ref, o_ref, y_ref,
                             *, d_true, d_pad, eps):
    # x_ref:    (tm, Dp)  row tile (zero-padded lanes)
    # w_ref:    (Dp, tn)  column tile of the linear weight (bf16)
    # bias_ref: (1,  tn)  fused bias slice
    # y_ref:    (tm, Dp)  scratch: normalized+scaled rows, reused across column tiles
    j = pl.program_id(1)

    @pl.when(j == 0)
    def _():
        x = x_ref[...].astype(jnp.float32)
        inv_d = jnp.float32(1.0 / d_true)
        mean = jnp.sum(x, axis=-1, keepdims=True) * inv_d  # padded lanes are zero
        if d_pad == d_true:
            centered = x - mean
        else:
            lane = lax.broadcasted_iota(jnp.int32, x.shape, 1)
            centered = jnp.where(lane < d_true, x - mean, 0.0)
        var = jnp.sum(centered * centered, axis=-1, keepdims=True) * inv_d
        xn = centered * lax.rsqrt(var + eps)
        # gamma is zero in padded lanes -> y is zero there (keeps matmul exact).
        y_ref[...] = (xn * gamma_ref[...].astype(jnp.float32)).astype(y_ref.dtype)

    acc = jnp.dot(y_ref[...], w_ref[...], preferred_element_type=jnp.float32)
    o_ref[...] = (acc + bias_ref[...].astype(jnp.float32)).astype(o_ref.dtype)


def prenorm(x, gamma, beta, w, b, *, mxu_dtype=jnp.bfloat16):
    """x: [B, N, D] -> [B, N, D]; applies fn(LayerNorm(x)) with fn = Linear(D, D)."""
    B, N, D = x.shape
    rows = B * N
    x2 = x.reshape(rows, D)

    x_item = jnp.dtype(x.dtype).itemsize
    mxu_item = jnp.dtype(mxu_dtype).itemsize

    vmem_cap = _vmem_capacity_bytes()
    budget = vmem_cap - (8 << 20)            # leave headroom for Mosaic scratch
    tm_target = 1024 if vmem_cap >= (96 << 20) else 512   # v5e/v6e vs v7x

    # Fold beta into the linear bias:
    #   (xn*gamma + beta) @ W + b = (xn*gamma) @ W + (beta @ W + b)
    bias_eff = (beta.astype(jnp.float32) @ w.astype(jnp.float32)
                + b.astype(jnp.float32)).reshape(1, D)
    gamma2 = gamma.astype(jnp.float32).reshape(1, D)

    # ---------------- Path 1: W resident in VMEM ----------------
    w_bytes = 2 * D * D * mxu_item            # W, double-buffered (fetched once anyway)
    small_bytes = 4 * D * 4                   # gamma + fused bias buffers

    def resident_footprint(tm):
        return (w_bytes + small_bytes
                + 2 * tm * D * x_item         # x row tile, double-buffered
                + 2 * tm * D * x_item)        # out row tile, double-buffered

    tm = min(tm_target, _round_up(rows, 8))
    if tm >= rows:
        tm = rows                             # full-extent row block (any size allowed)
    while tm > 8 and resident_footprint(tm) > budget:
        tm = max(8, tm // 2)

    if resident_footprint(tm) <= budget:
        w2 = w.astype(mxu_dtype)
        vmem_bytes = int(min(max(resident_footprint(tm) + (4 << 20), 32 << 20), budget))
        kernel = functools.partial(_prenorm_resident_kernel, eps=EPS)
        out = pl.pallas_call(
            kernel,
            out_shape=jax.ShapeDtypeStruct((rows, D), x.dtype),
            grid_spec=pltpu.PrefetchScalarGridSpec(
                num_scalar_prefetch=0,
                grid=(pl.cdiv(rows, tm),),
                in_specs=[
                    pl.BlockSpec((tm, D), lambda i: (i, 0)),   # x row tile
                    pl.BlockSpec((1, D), lambda i: (0, 0)),    # gamma (fetched once)
                    pl.BlockSpec((D, D), lambda i: (0, 0)),    # W (fetched once, resident)
                    pl.BlockSpec((1, D), lambda i: (0, 0)),    # fused bias (fetched once)
                ],
                out_specs=pl.BlockSpec((tm, D), lambda i: (i, 0)),
            ),
            compiler_params=pltpu.CompilerParams(
                dimension_semantics=("parallel",),
                vmem_limit_bytes=vmem_bytes),
        )(x2, gamma2, w2, bias_eff)
        return out.reshape(B, N, D)

    # ------------- Path 2: column-tiled fallback (very large D) -------------
    d_pad = max(128, _round_up(D, 128))
    tn = min(512, d_pad)
    while d_pad % tn != 0:
        tn -= 128

    def coltiled_footprint(tm_):
        return (2 * tm_ * d_pad * x_item        # x tile
                + 2 * d_pad * 4                 # gamma
                + 2 * d_pad * tn * mxu_item     # W column tile
                + 2 * tn * 4                    # fused bias
                + 2 * tm_ * tn * x_item         # out tile
                + tm_ * d_pad * mxu_item)       # y scratch

    tm = tm_target
    while tm > 8 and coltiled_footprint(tm) > budget:
        tm = max(8, tm // 2)
    rows_p = _round_up(rows, tm)

    gamma_p = jnp.zeros((1, d_pad), jnp.float32).at[:, :D].set(gamma2)
    bias_p = jnp.zeros((1, d_pad), jnp.float32).at[:, :D].set(bias_eff)
    w_p = jnp.zeros((d_pad, d_pad), mxu_dtype).at[:D, :D].set(w.astype(mxu_dtype))
    if rows_p == rows and d_pad == D:
        x_p = x2
    else:
        x_p = jnp.zeros((rows_p, d_pad), x.dtype).at[:rows, :D].set(x2)

    vmem_bytes = int(min(max(coltiled_footprint(tm) + (4 << 20), 32 << 20), budget))
    kernel = functools.partial(_prenorm_coltiled_kernel, d_true=D, d_pad=d_pad, eps=EPS)
    out_p = pl.pallas_call(
        kernel,
        out_shape=jax.ShapeDtypeStruct((rows_p, d_pad), x.dtype),
        grid_spec=pltpu.PrefetchScalarGridSpec(
            num_scalar_prefetch=0,
            grid=(rows_p // tm, d_pad // tn),
            in_specs=[
                pl.BlockSpec((tm, d_pad), lambda i, j: (i, 0)),   # x row tile
                pl.BlockSpec((1, d_pad), lambda i, j: (0, 0)),    # gamma
                pl.BlockSpec((d_pad, tn), lambda i, j: (0, j)),   # W column tile
                pl.BlockSpec((1, tn), lambda i, j: (0, j)),       # fused bias
            ],
            out_specs=pl.BlockSpec((tm, tn), lambda i, j: (i, j)),
            scratch_shapes=[pltpu.VMEM((tm, d_pad), mxu_dtype)],
        ),
        compiler_params=pltpu.CompilerParams(
            dimension_semantics=("parallel", "arbitrary"),
            vmem_limit_bytes=vmem_bytes),
    )(x_p, gamma_p, w_p, bias_p)
    return out_p[:rows, :D].reshape(B, N, D)


def prenorm_ref(x, gamma, beta, w, b):
    xf = x.astype(jnp.float32)
    mean = jnp.mean(xf, axis=-1, keepdims=True)
    var = jnp.mean((xf - mean) ** 2, axis=-1, keepdims=True)
    xn = (xf - mean) / jnp.sqrt(var + EPS)
    y = xn * gamma + beta
    return (y @ w + b).astype(x.dtype)


if __name__ == "__main__":
    B, N, D = 2, 8, 32  # batch, seq, dim

    key = jax.random.PRNGKey(0)
    kx, kg, kb, kw, kbi = jax.random.split(key, 5)

    x = jax.random.normal(kx, (B, N, D), dtype=jnp.float32)
    # LayerNorm params (perturbed from default init to make them non-trivial)
    gamma = 1.0 + 0.1 * jax.random.normal(kg, (D,), dtype=jnp.float32)
    beta = 0.1 * jax.random.normal(kb, (D,), dtype=jnp.float32)
    # fn = Linear(D, D)  # TODO(synk): PreNorm's fn is a generic callable; a Linear stands in here.
    w = jax.random.normal(kw, (D, D), dtype=jnp.float32) / jnp.sqrt(D)
    b = 0.1 * jax.random.normal(kbi, (D,), dtype=jnp.float32)

    out = prenorm(x, gamma, beta, w, b)
    out = jax.block_until_ready(out)

    ref = prenorm_ref(x, gamma, beta, w, b)
    assert out.shape == (B, N, D)
    # bf16 MXU operands -> bf16-appropriate tolerance
    assert jnp.allclose(out, ref, atol=3e-2, rtol=3e-2), "mismatch vs reference"

    print("KERNEL_OK")
</pallas_src>

<mosaic_0001>
module attributes {stable_mosaic.version = 11 : i64} {
  func.func @_prenorm_resident_kernel(%arg0: i32, %arg1: memref<16x32xf32, #tpu.memory_space<vmem>>, %arg2: memref<1x32xf32, #tpu.memory_space<vmem>>, %arg3: memref<32x32xbf16, #tpu.memory_space<vmem>>, %arg4: memref<1x32xf32, #tpu.memory_space<vmem>>, %arg5: memref<16x32xf32, #tpu.memory_space<vmem>>) attributes {dimension_semantics = [#tpu.dimension_semantics<parallel>], iteration_bounds = array<i64: 1>, scalar_prefetch = 0 : i64, scratch_operands = 0 : i64, tpu.core_type = #tpu.core_type<tc>, window_params = [{transform_indices = @transform_0, window_bounds = array<i64: 16, 32>}, {pipeline_mode = #tpu.pipeline_mode<synchronous>, transform_indices = @transform_1, window_bounds = array<i64: 1, 32>}, {pipeline_mode = #tpu.pipeline_mode<synchronous>, transform_indices = @transform_2, window_bounds = array<i64: 32, 32>}, {pipeline_mode = #tpu.pipeline_mode<synchronous>, transform_indices = @transform_3, window_bounds = array<i64: 1, 32>}, {transform_indices = @transform_4, window_bounds = array<i64: 16, 32>}]} {
    %c0 = arith.constant 0 : index
    %c0_0 = arith.constant 0 : index
    %0 = vector.load %arg1[%c0, %c0_0] : memref<16x32xf32, #tpu.memory_space<vmem>>, vector<16x32xf32>
    %cst = arith.constant dense<0.000000e+00> : vector<16xf32>
    %1 = vector.multi_reduction <add>, %0, %cst [1] : vector<16x32xf32> to vector<16xf32>
    %2 = vector.shape_cast %1 : vector<16xf32> to vector<16x1xf32>
    %cst_1 = arith.constant 3.200000e+01 : f32
    %3 = vector.broadcast %cst_1 : f32 to vector<16x1xf32>
    %4 = arith.divf %2, %3 : vector<16x1xf32>
    %5 = vector.broadcast %4 : vector<16x1xf32> to vector<16x32xf32>
    %6 = arith.subf %0, %5 : vector<16x32xf32>
    %7 = arith.mulf %6, %6 : vector<16x32xf32>
    %cst_2 = arith.constant dense<0.000000e+00> : vector<16xf32>
    %8 = vector.multi_reduction <add>, %7, %cst_2 [1] : vector<16x32xf32> to vector<16xf32>
    %9 = vector.shape_cast %8 : vector<16xf32> to vector<16x1xf32>
    %cst_3 = arith.constant 3.200000e+01 : f32
    %10 = vector.broadcast %cst_3 : f32 to vector<16x1xf32>
    %11 = arith.divf %9, %10 : vector<16x1xf32>
    %cst_4 = arith.constant 9.99999974E-6 : f32
    %12 = vector.broadcast %cst_4 : f32 to vector<16x1xf32>
    %13 = arith.addf %11, %12 : vector<16x1xf32>
    %14 = math.rsqrt %13 : vector<16x1xf32>
    %15 = vector.broadcast %14 : vector<16x1xf32> to vector<16x32xf32>
    %16 = arith.mulf %6, %15 : vector<16x32xf32>
    %c0_5 = arith.constant 0 : index
    %c0_6 = arith.constant 0 : index
    %17 = vector.load %arg2[%c0_5, %c0_6] : memref<1x32xf32, #tpu.memory_space<vmem>>, vector<1x32xf32>
    %18 = vector.broadcast %17 : vector<1x32xf32> to vector<16x32xf32>
    %19 = arith.mulf %16, %18 : vector<16x32xf32>
    %20 = arith.truncf %19 : vector<16x32xf32> to vector<16x32xbf16>
    %c0_7 = arith.constant 0 : index
    %c0_8 = arith.constant 0 : index
    %21 = vector.load %arg3[%c0_7, %c0_8] : memref<32x32xbf16, #tpu.memory_space<vmem>>, vector<32x32xbf16>
    %cst_9 = arith.constant dense<0.000000e+00> : vector<16x32xf32>
    %22 = tpu.matmul %20, %21, %cst_9 {dimension_numbers = #tpu.dot_dimension_numbers<[1], [0], [0], [1], [0, 0, 1, 1], [], []>} : vector<16x32xbf16>, vector<32x32xbf16>, vector<16x32xf32> -> vector<16x32xf32>
    %c0_10 = arith.constant 0 : index
    %c0_11 = arith.constant 0 : index
    %23 = vector.load %arg4[%c0_10, %c0_11] : memref<1x32xf32, #tpu.memory_space<vmem>>, vector<1x32xf32>
    %24 = vector.broadcast %23 : vector<1x32xf32> to vector<16x32xf32>
    %25 = arith.addf %22, %24 : vector<16x32xf32>
    %c0_12 = arith.constant 0 : index
    %c0_13 = arith.constant 0 : index
    %26 = vector.load %arg5[%c0_12, %c0_13] : memref<16x32xf32, #tpu.memory_space<vmem>>, vector<16x32xf32>
    tpu.vector_store %arg5[%c0_12, %c0_13], %25 {strides = array<i32>} : memref<16x32xf32, #tpu.memory_space<vmem>>, vector<16x32xf32>,
    return
  }
  func.func @transform_0(%arg0: i32) -> (i32, i32) {
    %c0_i32 = arith.constant 0 : i32
    %c0_i32_0 = arith.constant 0 : i32
    return %arg0, %c0_i32 : i32, i32
  }
  func.func @transform_1(%arg0: i32) -> (i32, i32) {
    %c0_i32 = arith.constant 0 : i32
    %c0_i32_0 = arith.constant 0 : i32
    %c0_i32_1 = arith.constant 0 : i32
    return %c0_i32, %c0_i32_0 : i32, i32
  }
  func.func @transform_2(%arg0: i32) -> (i32, i32) {
    %c0_i32 = arith.constant 0 : i32
    %c0_i32_0 = arith.constant 0 : i32
    %c0_i32_1 = arith.constant 0 : i32
    return %c0_i32, %c0_i32_0 : i32, i32
  }
  func.func @transform_3(%arg0: i32) -> (i32, i32) {
    %c0_i32 = arith.constant 0 : i32
    %c0_i32_0 = arith.constant 0 : i32
    %c0_i32_1 = arith.constant 0 : i32
    return %c0_i32, %c0_i32_0 : i32, i32
  }
  func.func @transform_4(%arg0: i32) -> (i32, i32) {
    %c0_i32 = arith.constant 0 : i32
    %c0_i32_0 = arith.constant 0 : i32
    return %arg0, %c0_i32 : i32, i32
  }
}

</mosaic_0001>

<llo_original>
// kernel: tpu_custom_call.1
$region0: #{tpu_custom_call.1}
  #allocation0 [shape = 'u32[]', space=smem, size = 0x4, offset = 0x4, fixed_abs, tag = 'smem constant byte address 0x4 - core index']
  #allocation1 [shape = 'u32[72,128]{1,0:T(1,128)}', space=vmem, size = 0x9000, scoped, tag = 'internal scratch']
  %s0 = inlined_call_operand.hbm [shape: f32[16,32], index: 0, kind: input, shape index: {}]
  %s1 = inlined_call_operand.hbm [shape: f32[1,32], index: 1, kind: input, shape index: {}]
  %s2 = inlined_call_operand.hbm [shape: bf16[32,32], index: 2, kind: input, shape index: {}]
  %s3 = inlined_call_operand.vmem [shape: f32[1,32], index: 3, kind: input, shape index: {}]
  %s4 = inlined_call_operand.hbm [shape: f32[16,32], index: 4, kind: output, shape index: {}]
  %s5 = sld [smem:[#allocation0]]
  $region38: #{tpu_custom_call.1} parent=0
    _
  %s7 = ssub.s32 1, %s5
  %s8 = scalar_select 0, %s7, %s5
  $region1: #{tpu_custom_call.1} parent=0
    #allocation2 [shape = 'u8[8192]{0}', space=vmem, size = 0x2000, scoped, tag = 'input window, operand 0, single buffered']
    #allocation3 [shape = 's32[1]{0}', space=sflag, size = 0x4, scoped, tag = 'scoped memory for tpu_custom_call.1']
    #allocation4 [shape = 's32[1]{0}', space=sflag, size = 0x4, scoped, tag = 'scoped memory for tpu_custom_call.1']
    #allocation5 [shape = 'u8[512]{0}', space=vmem, size = 0x400, scoped, tag = 'input window, operand 1, single buffered']
    #allocation6 [shape = 's32[1]{0}', space=sflag, size = 0x4, scoped, tag = 'scoped memory for tpu_custom_call.1']
    #allocation7 [shape = 'u8[8192]{0}', space=vmem, size = 0x2000, scoped, tag = 'input window, operand 2, single buffered']
    #allocation8 [shape = 'u8[8192]{0}', space=vmem, size = 0x2000, scoped, tag = 'output window, operand 0, single buffered']
    %9 = vsyncpa [#allocation3], 0
    %10 = vsyncpa [#allocation6], 0
    %11 = vsyncpa [#allocation4], 0
    // Predicated region
    $region2: #{tpu_custom_call.1} parent=1 // pred_check
      _
    $region3: #{tpu_custom_call.1} parent=1 // pred_check_branch
      %13 = sbr.rel (0) target = $region5
    $region4: #{tpu_custom_call.1} parent=1 // pred_region
      %15 = vsyncadd [#allocation3], 0
      %s16 = sshll.u32 %s0, 4
      %s17 = int_to_ptr.hbm [resolvable:$true] %s16
      %s18 = sshll.u32 [#allocation2], 4
      %s19 = int_to_ptr.vmem [resolvable:$true] %s18
      %24 = dma.hbm_to_vmem [thread:$0]  %s17, 256, %s19, [#allocation3], 128, 128, 8
    $region5: #{tpu_custom_call.1} parent=1 // pred_fallthru
      _
    // Predicated region
    $region6: #{tpu_custom_call.1} parent=1 // pred_check
      _
    $region7: #{tpu_custom_call.1} parent=1 // pred_check_branch
      %26 = sbr.rel (0) target = $region9
    $region8: #{tpu_custom_call.1} parent=1 // pred_region
      %28 = vsyncadd [#allocation6], 0
      %s30 = sshll.u32 %s1, 4
      %s31 = int_to_ptr.hbm [resolvable:$true] %s30
      %s32 = sshll.u32 [#allocation5], 4
      %s33 = int_to_ptr.vmem [resolvable:$true] %s32
      %35 = dma.hbm_to_vmem [thread:$0]  %s31, 16, %s33, [#allocation6]
    $region9: #{tpu_custom_call.1} parent=1 // pred_fallthru
      _
    // Predicated region
    $region10: #{tpu_custom_call.1} parent=1 // pred_check
      _
    $region11: #{tpu_custom_call.1} parent=1 // pred_check_branch
      %37 = sbr.rel (0) target = $region13
    $region12: #{tpu_custom_call.1} parent=1 // pred_region
      %39 = vsyncadd [#allocation6], 0
      %s40 = sshll.u32 %s2, 4
      %s41 = int_to_ptr.hbm [resolvable:$true] %s40
      %s42 = sshll.u32 [#allocation7], 4
      %s43 = int_to_ptr.vmem [resolvable:$true] %s42
      %48 = dma.hbm_to_vmem [thread:$0]  %s41, 256, %s43, [#allocation6], 64, 64, 4
    $region13: #{tpu_custom_call.1} parent=1 // pred_fallthru
      _
    // Predicated region
    $region14: #{tpu_custom_call.1} parent=1 // pred_check
      _
    $region15: #{tpu_custom_call.1} parent=1 // pred_check_branch
      %50 = sbr.rel (0) target = $region17
    $region16: #{tpu_custom_call.1} parent=1 // pred_region
      _
    $region17: #{tpu_custom_call.1} parent=1 // pred_fallthru
      _
    // Predicated region
    $region18: #{tpu_custom_call.1} parent=1 // pred_check
      _
    $region19: #{tpu_custom_call.1} parent=1 // pred_check_branch
      %52 = sbr.rel (0) target = $region21
    $region20: #{tpu_custom_call.1} parent=1 // pred_region
      %54 = dma.done [#allocation3], 256
    $region21: #{tpu_custom_call.1} parent=1 // pred_fallthru
      _
    // Predicated region
    $region22: #{tpu_custom_call.1} parent=1 // pred_check
      _
    $region23: #{tpu_custom_call.1} parent=1 // pred_check_branch
      %56 = sbr.rel (0) target = $region25
    $region24: #{tpu_custom_call.1} parent=1 // pred_region
      %58 = dma.done [#allocation6], 16
    $region25: #{tpu_custom_call.1} parent=1 // pred_fallthru
      _
    // Predicated region
    $region26: #{tpu_custom_call.1} parent=1 // pred_check
      _
    $region27: #{tpu_custom_call.1} parent=1 // pred_check_branch
      %60 = sbr.rel (0) target = $region29
    $region28: #{tpu_custom_call.1} parent=1 // pred_region
      %62 = dma.done [#allocation6], 256
    $region29: #{tpu_custom_call.1} parent=1 // pred_fallthru
      _
    %v64 = vld [vmem:[#allocation2] sm:$0xff]
    %v65 = vld [vmem:[#allocation2 + $0x8] sm:$0xff]
    %vm66 = vcmask 261120
    %v67 = vsel %vm66, %v64, 0.0
    %68 = vadd.xlane.f32.xlu0 %v67
    %v69 = vpop.xlane.xlu0 %68
    %v70 = vsel %vm66, %v65, 0.0
    %71 = vadd.xlane.f32.xlu0 %v70
    %v72 = vpop.xlane.xlu0 %71
    %v73 = vrcp.pop 32.0
    %v74 = vmul.f32 32.0, %v73
    %v75 = vsub.f32 1.0, %v74
    %v76 = vmul.f32 %v73, %v75
    %v77 = vadd.f32 %v73, %v76
    %vm78 = vweird.f32 %v73
    %v79 = vsel %vm78, %v73, %v77
    %v80 = vmul.f32 %v69, %v79
    %v81 = vmul.f32 %v72, %v79
    %v82 = vsub.f32 %v64, %v80
    %v83 = vsub.f32 %v65, %v81
    %v84 = vmul.f32 %v82, %v82
    %v85 = vmul.f32 %v83, %v83
    %v86 = vsel %vm66, %v84, 0.0
    %87 = vadd.xlane.f32.xlu0 %v86
    %v88 = vpop.xlane.xlu0 %87
    %v89 = vsel %vm66, %v85, 0.0
    %90 = vadd.xlane.f32.xlu0 %v89
    %v91 = vpop.xlane.xlu0 %90
    %v92 = vmul.f32 %v88, %v79
    %v93 = vmul.f32 %v91, %v79
    %v94 = vadd.f32 %v92, 1e-05
    %v95 = vadd.f32 %v93, 1e-05
    %v96 = vrsqrt.pop %v94
    %v97 = vmul.f32 %v96, %v94
    %v98 = vmul.f32 %v97, %v96
    %v99 = vmul.f32 0.5, %v98
    %v100 = vsub.f32 1.5, %v99
    %v101 = vmul.f32 %v96, %v100
    %vm102 = vweird.f32 %v94
    %vm103 = vweird.f32 %v96
    %vm104 = vmor %vm102, %vm103
    %v105 = vsel %vm104, %v96, %v101
    %v106 = vrsqrt.pop %v95
    %v107 = vmul.f32 %v106, %v95
    %v108 = vmul.f32 %v107, %v106
    %v109 = vmul.f32 0.5, %v108
    %v110 = vsub.f32 1.5, %v109
    %v111 = vmul.f32 %v106, %v110
    %vm112 = vweird.f32 %v95
    %vm113 = vweird.f32 %v106
    %vm114 = vmor %vm112, %vm113
    %v115 = vsel %vm114, %v106, %v111
    %v116 = vmul.f32 %v82, %v105
    %v117 = vmul.f32 %v83, %v115
    %v118 = vld [vmem:[#allocation5] sm:$0x1]
    %v120 = vperm.slane %v118, 0
    %v122 = vmul.f32 %v116, %v120
    %v123 = vmul.f32 %v117, %v120
    %v124 = vpack.c.bf16 %v123, %v122
    %v125 = vld [vmem:[#allocation7] sm:$0xf]
    %v126 = vld [vmem:[#allocation7 + $0x4] sm:$0xf]
    %v127 = vld [vmem:[#allocation7 + $0x8] sm:$0xf]
    %v128 = vld [vmem:[#allocation7 + $0xc] sm:$0xf]
    %v129 = vld [vmem:[%s3] sm:$0x1]
    %v131 = vperm.slane %v129, 0
    %v137 = vunpack.c.l.b16 %v125
    %v138 = vunpack.c.l.b16 %v126
    %v139 = vunpack.c.l.b16 %v127
    %v140 = vunpack.c.l.b16 %v128
    %v141 = vpack.c.b16 %v138, %v137
    %v142 = vpack.c.b16 %v140, %v139
    %v146 = vsel %vm66, %v124, 0
    %148 = vmatpush.bf16.msra.mxu0 0
    %149 = vmatpush.bf16.msra.mxu0 0
    %150 = vmatpush.bf16.msra.mxu0 0
    %151 = vmatpush.bf16.msra.mxu0 0
    %152 = vmatpush.bf16.msra.mxu0 0
    %153 = vmatpush.bf16.msra.mxu0 0
    %154 = vmatpush.bf16.msra.mxu0 %v142
    %155 = vmatpush.bf16.msra.mxu0 %v141
    %156 = vmatmul.bf16.gmra.mxu0 %v146
    %v157 = vpop.f32.mrf.mxu0
    %v158 = vadd.f32 %v131, %v157
    %v159 = vpop.f32.mrf.mxu0
    %v160 = vadd.f32 %v131, %v159
    %161 = vdwg.mxu0
    %162 = vst.msk [vmem:[#allocation8] sm:$0xff] %vm66, %v158
    %163 = vst.msk [vmem:[#allocation8 + $0x8] sm:$0xff] %vm66, %v160
    // Predicated region
    $region30: #{tpu_custom_call.1} parent=1 // pred_check
      _
    $region31: #{tpu_custom_call.1} parent=1 // pred_check_branch
      %165 = sbr.rel (0) target = $region33
    $region32: #{tpu_custom_call.1} parent=1 // pred_region
      %167 = vsyncadd [#allocation4], 0
      %s168 = sshll.u32 [#allocation8], 4
      %s169 = int_to_ptr.vmem [resolvable:$true] %s168
      %s170 = sshll.u32 %s4, 4
      %s171 = int_to_ptr.hbm [resolvable:$true] %s170
      %176 = dma.vmem_to_hbm [thread:$0]  %s169, 256, %s171, [#allocation4], 128, 128, 8
    $region33: #{tpu_custom_call.1} parent=1 // pred_fallthru
      _
    // Predicated region
    $region34: #{tpu_custom_call.1} parent=1 // pred_check
      _
    $region35: #{tpu_custom_call.1} parent=1 // pred_check_branch
      %178 = sbr.rel (0) target = $region37
    $region36: #{tpu_custom_call.1} parent=1 // pred_region
      %180 = dma.done [#allocation4], 256
    $region37: #{tpu_custom_call.1} parent=1 // pred_fallthru
      _
    %181 = vsyncpa [#allocation3], 1
    %182 = vsyncpa [#allocation6], 1
    %183 = vsyncpa [#allocation4], 1

</llo_original>
